<compile_context>
chip_gen: v5e
topology: v5e:2x2
jax: 0.10.0
libtpu: 0.0.40
codegen_flags: <defaults>
</compile_context>

<pallas_src>
import functools

import jax
import jax.numpy as jnp
from jax import lax
from jax.experimental import pallas as pl
from jax.experimental.pallas import tpu as pltpu

_LANE = 128     # last block dim should be a multiple of this (lane width)
_SUBLANE = 8    # second-to-last block dim multiple (sublane width)


def _round_up(x, m):
    return ((x + m - 1) // m) * m


def _intent_classifier_kernel(x_ref, w_ref, b_ref, o_ref):
    # x_ref: [TB, Dp]   w_ref: [Np, Dp] (native nn.Linear layout, lane-padded)
    # b_ref: [1, Np]    o_ref: [TB, Np]
    x = x_ref[...]
    w = w_ref[...]
    # Contract x's dim 1 with w's dim 1 (i.e. x @ w.T) on the MXU; no
    # transposed weight copy is ever materialized in HBM.
    acc = lax.dot_general(
        x, w,
        dimension_numbers=(((1,), (1,)), ((), ())),
        preferred_element_type=jnp.float32,
    )
    # Bias add in f32, single cast at the end (v5e has no bf16 VALU).
    o_ref[...] = (acc + b_ref[...]).astype(o_ref.dtype)


def prepare_intent_classifier_params(weight, bias):
    """One-time parameter prep (call at init, NOT per forward).

    weight: [N, D] (PyTorch nn.Linear layout), bias: [N]
    Returns lane-padded (w_pad [Np, Dp], b_pad [1, Np]); zero padding is exact
    for the affine map.
    """
    N, D = weight.shape
    Np = _round_up(N, _LANE)
    Dp = _round_up(D, _LANE)
    w_pad = jnp.zeros((Np, Dp), weight.dtype).at[:N, :D].set(weight)
    b_pad = jnp.zeros((1, Np), bias.dtype).at[0, :N].set(bias)
    return w_pad, b_pad


@functools.partial(jax.jit, static_argnames=("num_labels",))
def intent_classifier_forward(x, w_pad, b_pad, *, num_labels):
    """x: [B, D]; w_pad: [Np, Dp]; b_pad: [1, Np] -> logits [B, num_labels]."""
    B, D = x.shape
    Np, Dp = w_pad.shape

    # Batch tiling: full (sublane-rounded) batch when small; 256-row tiles when
    # large so the "parallel" grid axis can be split across TensorCores and
    # each double-buffered x tile stays small relative to VMEM (v7x: 64 MiB
    # physical / 32 MiB default scoped).
    TB = _round_up(B, _SUBLANE) if B <= 256 else 256
    Bp = _round_up(B, TB)

    # Zero-pad x to lane/sublane-aligned shape (zeros contribute nothing).
    x_pad = jnp.zeros((Bp, Dp), x.dtype).at[:B, :D].set(x)

    out = pl.pallas_call(
        _intent_classifier_kernel,
        out_shape=jax.ShapeDtypeStruct((Bp, Np), x.dtype),
        grid=(Bp // TB,),
        in_specs=[
            pl.BlockSpec((TB, Dp), lambda i: (i, 0)),   # x tile per batch step
            pl.BlockSpec((Np, Dp), lambda i: (0, 0)),   # weight, resident
            pl.BlockSpec((1, Np), lambda i: (0, 0)),    # bias, resident
        ],
        out_specs=pl.BlockSpec((TB, Np), lambda i: (i, 0)),
        compiler_params=pltpu.CompilerParams(
            dimension_semantics=("parallel",),
        ),
    )(x_pad, w_pad, b_pad)

    # Strip padding outside the kernel (cheap XLA slice).
    return out[:B, :num_labels]


def _reference_forward(x, weight, bias):
    # Pure-JAX reference matching torch: dropout(p=0) is identity, then Linear.
    return x @ weight.T + bias


if __name__ == "__main__":
    # Small shapes consistent with the module's forward:
    #   input_dim = 32, num_intent_labels = 8, batch = 8
    B, D, N = 8, 32, 8

    key = jax.random.PRNGKey(0)
    kx, kw, kb = jax.random.split(key, 3)

    x = jax.random.normal(kx, (B, D), dtype=jnp.float32)
    # Deterministic PyTorch-like uniform(-1/sqrt(D), 1/sqrt(D)) init.
    bound = 1.0 / (D ** 0.5)
    weight = jax.random.uniform(kw, (N, D), minval=-bound, maxval=bound,
                                dtype=jnp.float32)
    bias = jax.random.uniform(kb, (N,), minval=-bound, maxval=bound,
                              dtype=jnp.float32)

    # One-time parameter padding (outside the per-call hot path).
    w_pad, b_pad = prepare_intent_classifier_params(weight, bias)

    out = intent_classifier_forward(x, w_pad, b_pad, num_labels=N)
    out = jax.block_until_ready(out)

    ref = _reference_forward(x, weight, bias)
    assert out.shape == (B, N)
    assert jnp.allclose(out, ref, atol=1e-5, rtol=1e-5), "mismatch vs reference"

    print("KERNEL_OK")
</pallas_src>

<mosaic_0001>
module attributes {stable_mosaic.version = 11 : i64} {
  func.func @_intent_classifier_kernel(%arg0: i32, %arg1: memref<8x128xf32, #tpu.memory_space<vmem>>, %arg2: memref<128x128xf32, #tpu.memory_space<vmem>>, %arg3: memref<1x128xf32, #tpu.memory_space<vmem>>, %arg4: memref<8x128xf32, #tpu.memory_space<vmem>>) attributes {dimension_semantics = [#tpu.dimension_semantics<parallel>], iteration_bounds = array<i64: 1>, scalar_prefetch = 0 : i64, scratch_operands = 0 : i64, tpu.core_type = #tpu.core_type<tc>, window_params = [{transform_indices = @transform_0, window_bounds = array<i64: 8, 128>}, {pipeline_mode = #tpu.pipeline_mode<synchronous>, transform_indices = @transform_1, window_bounds = array<i64: 128, 128>}, {pipeline_mode = #tpu.pipeline_mode<synchronous>, transform_indices = @transform_2, window_bounds = array<i64: 1, 128>}, {transform_indices = @transform_3, window_bounds = array<i64: 8, 128>}]} {
    %c0 = arith.constant 0 : index
    %c0_0 = arith.constant 0 : index
    %0 = vector.load %arg1[%c0, %c0_0] : memref<8x128xf32, #tpu.memory_space<vmem>>, vector<8x128xf32>
    %c0_1 = arith.constant 0 : index
    %c0_2 = arith.constant 0 : index
    %1 = vector.load %arg2[%c0_1, %c0_2] : memref<128x128xf32, #tpu.memory_space<vmem>>, vector<128x128xf32>
    %cst = arith.constant dense<0.000000e+00> : vector<8x128xf32>
    %2 = tpu.matmul %0, %1, %cst {dimension_numbers = #tpu.dot_dimension_numbers<[1], [1], [0], [0], [0, 0, 1, 0], [], []>} : vector<8x128xf32>, vector<128x128xf32>, vector<8x128xf32> -> vector<8x128xf32>
    %c0_3 = arith.constant 0 : index
    %c0_4 = arith.constant 0 : index
    %3 = vector.load %arg3[%c0_3, %c0_4] : memref<1x128xf32, #tpu.memory_space<vmem>>, vector<1x128xf32>
    %4 = vector.broadcast %3 : vector<1x128xf32> to vector<8x128xf32>
    %5 = arith.addf %2, %4 : vector<8x128xf32>
    %c0_5 = arith.constant 0 : index
    %c0_6 = arith.constant 0 : index
    %6 = vector.load %arg4[%c0_5, %c0_6] : memref<8x128xf32, #tpu.memory_space<vmem>>, vector<8x128xf32>
    tpu.vector_store %arg4[%c0_5, %c0_6], %5 {strides = array<i32>} : memref<8x128xf32, #tpu.memory_space<vmem>>, vector<8x128xf32>,
    return
  }
  func.func @transform_0(%arg0: i32) -> (i32, i32) {
    %c0_i32 = arith.constant 0 : i32
    %c0_i32_0 = arith.constant 0 : i32
    return %arg0, %c0_i32 : i32, i32
  }
  func.func @transform_1(%arg0: i32) -> (i32, i32) {
    %c0_i32 = arith.constant 0 : i32
    %c0_i32_0 = arith.constant 0 : i32
    %c0_i32_1 = arith.constant 0 : i32
    return %c0_i32, %c0_i32_0 : i32, i32
  }
  func.func @transform_2(%arg0: i32) -> (i32, i32) {
    %c0_i32 = arith.constant 0 : i32
    %c0_i32_0 = arith.constant 0 : i32
    %c0_i32_1 = arith.constant 0 : i32
    return %c0_i32, %c0_i32_0 : i32, i32
  }
  func.func @transform_3(%arg0: i32) -> (i32, i32) {
    %c0_i32 = arith.constant 0 : i32
    %c0_i32_0 = arith.constant 0 : i32
    return %arg0, %c0_i32 : i32, i32
  }
}

</mosaic_0001>

<llo_original>
// kernel: intent_classifier_forward.1
$region0: #{intent_classifier_forward.1}
  #allocation0 [shape = 'u32[]', space=smem, size = 0x4, offset = 0x4, fixed_abs, tag = 'smem constant byte address 0x4 - core index']
  #allocation1 [shape = 'u32[72,128]{1,0:T(1,128)}', space=vmem, size = 0x9000, scoped, tag = 'internal scratch']
  %s0 = inlined_call_operand.vmem [shape: f32[8,128], index: 0, kind: input, shape index: {}]
  %s1 = inlined_call_operand.hbm [shape: f32[128,128], index: 1, kind: input, shape index: {}]
  %s2 = inlined_call_operand.vmem [shape: f32[1,128], index: 2, kind: input, shape index: {}]
  %s3 = inlined_call_operand.hbm [shape: f32[8,128], index: 3, kind: output, shape index: {}]
  %s4 = sld [smem:[#allocation0]]
  $region26: #{intent_classifier_forward.1} parent=0
    _
  %s6 = ssub.s32 1, %s4
  %s7 = scalar_select 0, %s6, %s4
  $region1: #{intent_classifier_forward.1} parent=0
    #allocation2 [shape = 'u8[65536]{0}', space=vmem, size = 0x10000, scoped, tag = 'input window, operand 1, single buffered']
    #allocation3 [shape = 's32[1]{0}', space=sflag, size = 0x4, scoped, tag = 'scoped memory for intent_classifier_forward.1']
    #allocation4 [shape = 's32[1]{0}', space=sflag, size = 0x4, scoped, tag = 'scoped memory for intent_classifier_forward.1']
    #allocation5 [shape = 'u8[4096]{0}', space=vmem, size = 0x1000, scoped, tag = 'output window, operand 0, single buffered']
    %8 = vsyncpa [#allocation3], 0
    %9 = vsyncpa [#allocation4], 0
    // Predicated region
    $region2: #{intent_classifier_forward.1} parent=1 // pred_check
      _
    $region3: #{intent_classifier_forward.1} parent=1 // pred_check_branch
      %11 = sbr.rel (0) target = $region5
    $region4: #{intent_classifier_forward.1} parent=1 // pred_region
      _
    $region5: #{intent_classifier_forward.1} parent=1 // pred_fallthru
      _
    // Predicated region
    $region6: #{intent_classifier_forward.1} parent=1 // pred_check
      _
    $region7: #{intent_classifier_forward.1} parent=1 // pred_check_branch
      %13 = sbr.rel (0) target = $region9
    $region8: #{intent_classifier_forward.1} parent=1 // pred_region
      %15 = vsyncadd [#allocation3], 0
      %s16 = sshll.u32 %s1, 4
      %s17 = int_to_ptr.hbm [resolvable:$true] %s16
      %s18 = sshll.u32 [#allocation2], 4
      %s19 = int_to_ptr.vmem [resolvable:$true] %s18
      %24 = dma.hbm_to_vmem [thread:$0]  %s17, 2048, %s19, [#allocation3], 128, 128, 8
    $region9: #{intent_classifier_forward.1} parent=1 // pred_fallthru
      _
    // Predicated region
    $region10: #{intent_classifier_forward.1} parent=1 // pred_check
      _
    $region11: #{intent_classifier_forward.1} parent=1 // pred_check_branch
      %26 = sbr.rel (0) target = $region13
    $region12: #{intent_classifier_forward.1} parent=1 // pred_region
      _
    $region13: #{intent_classifier_forward.1} parent=1 // pred_fallthru
      _
    // Predicated region
    $region14: #{intent_classifier_forward.1} parent=1 // pred_check
      _
    $region15: #{intent_classifier_forward.1} parent=1 // pred_check_branch
      %28 = sbr.rel (0) target = $region17
    $region16: #{intent_classifier_forward.1} parent=1 // pred_region
      %30 = dma.done [#allocation3], 2048
    $region17: #{intent_classifier_forward.1} parent=1 // pred_fallthru
      _
    %v31 = vld [vmem:[%s0] sm:$0xff]
    %v32 = vld [vmem:[#allocation2] sm:$0xff]
    %v33 = vld [vmem:[#allocation2 + $0x8] sm:$0xff]
    %v34 = vld [vmem:[#allocation2 + $0x10] sm:$0xff]
    %v35 = vld [vmem:[#allocation2 + $0x18] sm:$0xff]
    %v36 = vld [vmem:[#allocation2 + $0x20] sm:$0xff]
    %v37 = vld [vmem:[#allocation2 + $0x28] sm:$0xff]
    %v38 = vld [vmem:[#allocation2 + $0x30] sm:$0xff]
    %v39 = vld [vmem:[#allocation2 + $0x38] sm:$0xff]
    %v40 = vld [vmem:[#allocation2 + $0x40] sm:$0xff]
    %v41 = vld [vmem:[#allocation2 + $0x48] sm:$0xff]
    %v42 = vld [vmem:[#allocation2 + $0x50] sm:$0xff]
    %v43 = vld [vmem:[#allocation2 + $0x58] sm:$0xff]
    %v44 = vld [vmem:[#allocation2 + $0x60] sm:$0xff]
    %v45 = vld [vmem:[#allocation2 + $0x68] sm:$0xff]
    %v46 = vld [vmem:[#allocation2 + $0x70] sm:$0xff]
    %v47 = vld [vmem:[#allocation2 + $0x78] sm:$0xff]
    %v48 = vld [vmem:[%s2] sm:$0x1]
    %v50 = vperm.slane %v48, 0
    %52 = vmatpush.xpose.msra.mxu0 %v47
    %53 = vmatpush.xpose.msra.mxu0 %v46
    %54 = vmatpush.xpose.msra.mxu0 %v45
    %55 = vmatpush.xpose.msra.mxu0 %v44
    %56 = vmatpush.xpose.msra.mxu0 %v43
    %57 = vmatpush.xpose.msra.mxu0 %v42
    %58 = vmatpush.xpose.msra.mxu0 %v41
    %59 = vmatpush.xpose.msra.mxu0 %v40
    %60 = vmatpush.xpose.msra.mxu0 %v39
    %61 = vmatpush.xpose.msra.mxu0 %v38
    %62 = vmatpush.xpose.msra.mxu0 %v37
    %63 = vmatpush.xpose.msra.mxu0 %v36
    %64 = vmatpush.xpose.msra.mxu0 %v35
    %65 = vmatpush.xpose.msra.mxu0 %v34
    %66 = vmatpush.xpose.msra.mxu0 %v33
    %67 = vmatpush.xpose.msra.mxu0 %v32
    %68 = vmatmul.f32.gmra.mxu0 %v31
    %v69 = vpop.f32.mrf.mxu0
    %v70 = vadd.f32 %v50, %v69
    %71 = vdwg.mxu0
    %72 = vst [vmem:[#allocation5] sm:$0xff] %v70
    // Predicated region
    $region18: #{intent_classifier_forward.1} parent=1 // pred_check
      _
    $region19: #{intent_classifier_forward.1} parent=1 // pred_check_branch
      %74 = sbr.rel (0) target = $region21
    $region20: #{intent_classifier_forward.1} parent=1 // pred_region
      %76 = vsyncadd [#allocation4], 0
      %s78 = sshll.u32 [#allocation5], 4
      %s79 = int_to_ptr.vmem [resolvable:$true] %s78
      %s80 = sshll.u32 %s3, 4
      %s81 = int_to_ptr.hbm [resolvable:$true] %s80
      %83 = dma.vmem_to_hbm [thread:$0]  %s79, 128, %s81, [#allocation4]
    $region21: #{intent_classifier_forward.1} parent=1 // pred_fallthru
      _
    // Predicated region
    $region22: #{intent_classifier_forward.1} parent=1 // pred_check
      _
    $region23: #{intent_classifier_forward.1} parent=1 // pred_check_branch
      %85 = sbr.rel (0) target = $region25
    $region24: #{intent_classifier_forward.1} parent=1 // pred_region
      %87 = dma.done [#allocation4], 128
    $region25: #{intent_classifier_forward.1} parent=1 // pred_fallthru
      _
    %88 = vsyncpa [#allocation3], 1
    %89 = vsyncpa [#allocation4], 1

</llo_original>
